<compile_context>
chip_gen: v6e
topology: v6e:2x2x1
jax: 0.10.0
libtpu: 0.0.40
codegen_flags: <defaults>
</compile_context>

<pallas_src>
import functools

import jax
import jax.numpy as jnp
from jax import lax
from jax.experimental import pallas as pl
from jax.experimental.pallas import tpu as pltpu

EPS = 1e-5
NEG_SLOPE = 0.01  # PyTorch nn.LeakyReLU default


def _round_up(a, m):
    return (a + m - 1) // m * m


def _vmem_capacity_bytes():
    """Per-TensorCore VMEM capacity; conservative fallback if the query fails."""
    try:
        info = pltpu.get_tpu_info()
        cap = getattr(info, "vmem_capacity_bytes", None)
        if cap:
            return int(cap)
    except Exception:
        pass
    return 64 << 20  # v7x has the smallest VMEM (64 MiB) -> safe everywhere


# ----------------------------------------------------------------------------
# Fast path: whole batch resident in VMEM, single invocation, exact centered BN.
# ----------------------------------------------------------------------------
def latent_disc_single_kernel(x_ref, w1t_ref, b1_ref, gamma_ref, beta_ref,
                              w2row_ref, b2_ref, o_ref):
    h = jnp.dot(x_ref[...], w1t_ref[...],
                preferred_element_type=jnp.float32) + b1_ref[...]        # [B, Hp]
    mean = jnp.mean(h, axis=0, keepdims=True)                            # [1, Hp]
    c = h - mean
    var = jnp.mean(c * c, axis=0, keepdims=True)                         # biased (train) var
    scale = gamma_ref[...] * lax.rsqrt(var + EPS)
    shift = beta_ref[...] - mean * scale
    bn = h * scale + shift
    a = jnp.maximum(bn, NEG_SLOPE * bn)                                  # LeakyReLU
    # Head Linear(Hp -> 1) as VPU multiply + XLU lane reduce; padded lanes of w2
    # are zero so they contribute nothing.
    out = jnp.sum(a * w2row_ref[...], axis=-1, keepdims=True) + b2_ref[0, 0]
    o_ref[...] = out.astype(o_ref.dtype)


# ----------------------------------------------------------------------------
# Streaming path: grid = (phase, batch_tile).  Phase 0 streams x tiles through
# layer1, (optionally) caches h in VMEM and accumulates exact full-batch
# sum/sumsq.  Phase 1 folds the stats into scale/shift once, then normalizes,
# applies LeakyReLU and the head per tile.
# ----------------------------------------------------------------------------
def latent_disc_two_phase_kernel(x_ref, w1t_ref, b1_ref, gamma_ref, beta_ref,
                                 w2row_ref, b2_ref, o_ref,
                                 sum_ref, sq_ref, h_ref,
                                 *, b_actual, tile_b, n_tiles, cache_h):
    ph = pl.program_id(0)   # 0 = layer1 + batch stats, 1 = normalize + head
    t = pl.program_id(1)    # batch-tile index
    rows_last = b_actual - (n_tiles - 1) * tile_b   # valid rows in the last tile
    ragged = rows_last != tile_b                    # static Python bool

    @pl.when(jnp.logical_and(ph == 0, t == 0))
    def _():
        sum_ref[...] = jnp.zeros_like(sum_ref)
        sq_ref[...] = jnp.zeros_like(sq_ref)

    @pl.when(ph == 0)
    def _():
        h = jnp.dot(x_ref[...], w1t_ref[...],
                    preferred_element_type=jnp.float32) + b1_ref[...]    # [tile_b, Hp]
        if cache_h:
            off = pl.multiple_of(t * tile_b, tile_b)
            h_ref[pl.ds(off, tile_b), :] = h
        if ragged:
            # Only the last tile holds garbage (Pallas-ragged) rows: zero them out
            # of the statistics.  Full tiles accumulate unmasked.
            rows = lax.broadcasted_iota(jnp.int32, (tile_b, 1), 0)
            keep = jnp.logical_or(t != n_tiles - 1, rows < rows_last)
            h = jnp.where(keep, h, 0.0)
        sum_ref[...] += jnp.sum(h, axis=0, keepdims=True)
        sq_ref[...] += jnp.sum(h * h, axis=0, keepdims=True)

    # Hoisted: fold full-batch stats into one scale/shift, reusing the stats
    # scratch to hold them for the remaining phase-1 tiles.
    @pl.when(jnp.logical_and(ph == 1, t == 0))
    def _():
        inv_n = 1.0 / b_actual
        mean = sum_ref[...] * inv_n
        # TODO(synk): E[h^2]-E[h]^2 can cancel for huge B / large feature means;
        # switch to a centered / Welford combine if reused beyond this scale.
        var = sq_ref[...] * inv_n - mean * mean
        scale = gamma_ref[...] * lax.rsqrt(var + EPS)
        sum_ref[...] = scale
        sq_ref[...] = beta_ref[...] - mean * scale

    @pl.when(ph == 1)
    def _():
        if cache_h:
            off = pl.multiple_of(t * tile_b, tile_b)
            h = h_ref[pl.ds(off, tile_b), :]
        else:
            h = jnp.dot(x_ref[...], w1t_ref[...],
                        preferred_element_type=jnp.float32) + b1_ref[...]
        bn = h * sum_ref[...] + sq_ref[...]              # BatchNorm1d (training stats)
        a = jnp.maximum(bn, NEG_SLOPE * bn)              # LeakyReLU
        out = jnp.sum(a * w2row_ref[...], axis=-1, keepdims=True) + b2_ref[0, 0]
        # Note: the out_specs index map is (ph*t, 0); phase 0 never writes o_ref,
        # so the only data that ends up at HBM block t is this phase-1 store.
        o_ref[...] = out.astype(o_ref.dtype)


# ----------------------------------------------------------------------------
# Wrapper
# ----------------------------------------------------------------------------
def latent_discriminator(x, params, *, block_b=4096, single_shot_max_b=4096,
                         cache_h=None, matmul_dtype=None):
    """x: [B, D_in] float32.  params: dict of w1, b1, gamma, beta, w2, b2."""
    B, D_in = x.shape
    H = params["w1"].shape[0]
    Hp = _round_up(max(H, 128), 128)           # lane-dense hidden width
    f32 = jnp.float32
    mdt = f32 if matmul_dtype is None else jnp.dtype(matmul_dtype)
    itemsize = jnp.dtype(mdt).itemsize

    # Matmul operands may be bf16 (v6e/v7x traffic/MXU win); everything else f32.
    xq = x.astype(mdt)
    # Zero-pad the hidden dim to Hp.  Padded lanes are inert:
    #   W1 cols = 0, b1 = 0  -> h_pad = 0 ; gamma = 1, beta = 0 -> bn_pad = 0
    #   W2 rows = 0          -> head contribution = 0
    w1t = jnp.zeros((D_in, Hp), mdt).at[:, :H].set(params["w1"].T.astype(mdt))
    b1 = jnp.zeros((1, Hp), f32).at[0, :H].set(params["b1"].astype(f32))
    gamma = jnp.ones((1, Hp), f32).at[0, :H].set(params["gamma"].astype(f32))
    beta = jnp.zeros((1, Hp), f32).at[0, :H].set(params["beta"].astype(f32))
    w2row = jnp.zeros((1, Hp), f32).at[0, :H].set(params["w2"].reshape(-1).astype(f32))
    b2 = params["b2"].reshape(1, 1).astype(f32)

    vmem = pltpu.MemorySpace.VMEM
    smem = pltpu.MemorySpace.SMEM
    vmem_cap = _vmem_capacity_bytes()
    budget = int(0.85 * vmem_cap)
    lane_row_bytes = 128 * 4
    param_bytes = _round_up(D_in, 8) * Hp * itemsize + 5 * Hp * 4

    # ----------------- single-shot fast path (MNIST-scale batches) ----------
    b8 = _round_up(B, 8)
    single_needed = (b8 * max(_round_up(D_in, 128), 128) * itemsize   # x resident
                     + b8 * lane_row_bytes                            # (B,1) out (lane-padded)
                     + 2 * b8 * Hp * 4                                # h / bn working set
                     + param_bytes
                     + (4 << 20))                                     # vreg/spill slack
    if B <= single_shot_max_b and single_needed <= budget:
        vmem_limit = int(min(max(single_needed, 32 << 20), budget))
        return pl.pallas_call(
            latent_disc_single_kernel,
            out_shape=jax.ShapeDtypeStruct((B, 1), f32),
            in_specs=[pl.BlockSpec(memory_space=vmem)] * 6
                     + [pl.BlockSpec(memory_space=smem)],
            out_specs=pl.BlockSpec(memory_space=vmem),
            compiler_params=pltpu.CompilerParams(vmem_limit_bytes=vmem_limit),
        )(xq, w1t, b1, gamma, beta, w2row, b2)

    # ----------------- two-phase streaming path ------------------------------
    tb = _round_up(min(block_b, B), 8)

    def nocache_bytes(tb_):
        return (2 * tb_ * max(_round_up(D_in, 128), 128) * itemsize   # x (double-buffered)
                + 2 * tb_ * lane_row_bytes                            # (tb,1) out (lane-padded, x2)
                + 2 * param_bytes                                     # resident params (x2)
                + 2 * Hp * 4                                          # stats scratch
                + (8 << 20))                                          # vreg/spill slack

    while nocache_bytes(tb) > budget and tb > 512:
        tb = _round_up(tb // 2, 8)

    n_bt = pl.cdiv(B, tb)
    Bp = n_bt * tb
    h_cache_bytes = Bp * Hp * 4
    if cache_h is None:
        # Cache the layer-1 activation when it fits: phase 1 then skips the second
        # x pass and the second matmul.
        cache_h = nocache_bytes(tb) + h_cache_bytes <= budget
    needed = nocache_bytes(tb) + (h_cache_bytes if cache_h else 8 * Hp * 4)
    vmem_limit = int(min(max(needed, 32 << 20), budget))

    const = lambda ph, t: (0, 0)
    if cache_h:
        # Phase 1 never reads x (h is cached): pin its x block index to 0 so at most
        # one redundant DMA happens at the phase boundary.
        x_map = lambda ph, t: ((1 - ph) * t, 0)
    else:
        x_map = lambda ph, t: (t, 0)

    kernel = functools.partial(latent_disc_two_phase_kernel,
                               b_actual=B, tile_b=tb, n_tiles=n_bt, cache_h=cache_h)

    out = pl.pallas_call(
        kernel,
        out_shape=jax.ShapeDtypeStruct((B, 1), f32),
        grid=(2, n_bt),                         # (phase, batch tile); phase-major
        in_specs=[
            pl.BlockSpec((tb, D_in), x_map, memory_space=vmem),          # x tile
            pl.BlockSpec((D_in, Hp), const, memory_space=vmem),          # W1^T
            pl.BlockSpec((1, Hp), const, memory_space=vmem),             # b1
            pl.BlockSpec((1, Hp), const, memory_space=vmem),             # gamma
            pl.BlockSpec((1, Hp), const, memory_space=vmem),             # beta
            pl.BlockSpec((1, Hp), const, memory_space=vmem),             # w2 row
            pl.BlockSpec((1, 1), const, memory_space=smem),              # b2 scalar
        ],
        # Phase 0 always maps to output block 0 and never stores; phase 1 writes
        # every tile exactly once (any stale pre-writeback of block 0 is overwritten
        # by phase 1, tile 0 -- see in-kernel comment).
        out_specs=pl.BlockSpec((tb, 1), lambda ph, t: (ph * t, 0), memory_space=vmem),
        scratch_shapes=[
            pltpu.VMEM((1, Hp), f32),                        # sum   -> later: scale
            pltpu.VMEM((1, Hp), f32),                        # sumsq -> later: shift
            pltpu.VMEM((Bp if cache_h else 8, Hp), f32),     # cached layer-1 activation
        ],
        compiler_params=pltpu.CompilerParams(
            dimension_semantics=("arbitrary", "arbitrary"),
            vmem_limit_bytes=vmem_limit,
        ),
    )(xq, w1t, b1, gamma, beta, w2row, b2)
    return out


# ----------------------------------------------------------------------------
# Params / reference / test
# ----------------------------------------------------------------------------
def init_params(key, d_in, feature_multiplier=1):
    """Deterministic init mimicking PyTorch Linear defaults (U(-1/sqrt(fan_in), +))."""
    H = 16 * feature_multiplier
    k1, k2, k3, k4 = jax.random.split(key, 4)
    bound1 = 1.0 / jnp.sqrt(jnp.float32(d_in))
    bound2 = 1.0 / jnp.sqrt(jnp.float32(H))
    return {
        "w1": jax.random.uniform(k1, (H, d_in), jnp.float32, -bound1, bound1),
        "b1": jax.random.uniform(k2, (H,), jnp.float32, -bound1, bound1),
        "gamma": jnp.ones((H,), jnp.float32),   # BatchNorm1d weight init
        "beta": jnp.zeros((H,), jnp.float32),   # BatchNorm1d bias init
        "w2": jax.random.uniform(k3, (1, H), jnp.float32, -bound2, bound2),
        "b2": jax.random.uniform(k4, (1,), jnp.float32, -bound2, bound2),
    }


def reference(x, p):
    """Pure-JAX reference of the PyTorch forward (training-mode batchnorm)."""
    h = x @ p["w1"].T + p["b1"]
    mean = h.mean(axis=0, keepdims=True)
    var = ((h - mean) ** 2).mean(axis=0, keepdims=True)
    h = (h - mean) / jnp.sqrt(var + EPS) * p["gamma"] + p["beta"]
    h = jnp.where(h >= 0, h, NEG_SLOPE * h)
    return h @ p["w2"].T + p["b2"]


if __name__ == "__main__":
    key = jax.random.PRNGKey(0)
    kx, kp = jax.random.split(key)

    # Small shapes consistent with the module: B=300 (not a multiple of 8/128)
    # exercises the ragged-batch handling without any host-side padding.
    B, D_IN, MUL = 300, 32, 1
    x = jax.random.normal(kx, (B, D_IN), jnp.float32)
    params = init_params(kp, D_IN, MUL)
    ref = reference(x, params)

    def check(out):
        out = jax.block_until_ready(out)
        assert out.shape == (B, 1), out.shape
        err = float(jnp.max(jnp.abs(out - ref)))
        assert jnp.allclose(out, ref, atol=1e-3, rtol=1e-3), err
        return out

    # 1) Single-shot fast path (default dispatch at MNIST-scale B).
    check(latent_discriminator(x, params))

    # 2) Two-phase streaming path with the cached-h VMEM scratch (forced via small
    #    tiles): exercises the ragged last tile, masked stats and hoisted scale/shift.
    check(latent_discriminator(x, params, block_b=128, single_shot_max_b=0))

    # 3) Two-phase recompute path (h cache disabled): the large-B fallback.
    check(latent_discriminator(x, params, block_b=128, single_shot_max_b=0, cache_h=False))

    print("KERNEL_OK")
</pallas_src>

<mosaic_0001>
module attributes {stable_mosaic.version = 11 : i64} {
  func.func @latent_disc_single_kernel(%arg0: memref<300x32xf32, #tpu.memory_space<vmem>>, %arg1: memref<32x128xf32, #tpu.memory_space<vmem>>, %arg2: memref<1x128xf32, #tpu.memory_space<vmem>>, %arg3: memref<1x128xf32, #tpu.memory_space<vmem>>, %arg4: memref<1x128xf32, #tpu.memory_space<vmem>>, %arg5: memref<1x128xf32, #tpu.memory_space<vmem>>, %arg6: memref<1x1xf32, #tpu.memory_space<smem>>, %arg7: memref<300x1xf32, #tpu.memory_space<vmem>>) attributes {dimension_semantics = [], scalar_prefetch = 0 : i64, scratch_operands = 0 : i64, tpu.core_type = #tpu.core_type<tc>} {
    %c0 = arith.constant 0 : index
    %c0_0 = arith.constant 0 : index
    %0 = vector.load %arg0[%c0, %c0_0] : memref<300x32xf32, #tpu.memory_space<vmem>>, vector<300x32xf32>
    %c0_1 = arith.constant 0 : index
    %c0_2 = arith.constant 0 : index
    %1 = vector.load %arg1[%c0_1, %c0_2] : memref<32x128xf32, #tpu.memory_space<vmem>>, vector<32x128xf32>
    %cst = arith.constant dense<0.000000e+00> : vector<300x128xf32>
    %2 = tpu.matmul %0, %1, %cst {dimension_numbers = #tpu.dot_dimension_numbers<[1], [0], [0], [1], [0, 0, 1, 1], [], []>} : vector<300x32xf32>, vector<32x128xf32>, vector<300x128xf32> -> vector<300x128xf32>
    %c0_3 = arith.constant 0 : index
    %c0_4 = arith.constant 0 : index
    %3 = vector.load %arg2[%c0_3, %c0_4] : memref<1x128xf32, #tpu.memory_space<vmem>>, vector<1x128xf32>
    %4 = vector.broadcast %3 : vector<1x128xf32> to vector<300x128xf32>
    %5 = arith.addf %2, %4 : vector<300x128xf32>
    %cst_5 = arith.constant dense<0.000000e+00> : vector<128xf32>
    %6 = vector.multi_reduction <add>, %5, %cst_5 [0] : vector<300x128xf32> to vector<128xf32>
    %7 = vector.shape_cast %6 : vector<128xf32> to vector<1x128xf32>
    %cst_6 = arith.constant 3.000000e+02 : f32
    %8 = vector.broadcast %cst_6 : f32 to vector<1x128xf32>
    %9 = arith.divf %7, %8 : vector<1x128xf32>
    %10 = vector.broadcast %9 : vector<1x128xf32> to vector<300x128xf32>
    %11 = arith.subf %5, %10 : vector<300x128xf32>
    %12 = arith.mulf %11, %11 : vector<300x128xf32>
    %cst_7 = arith.constant dense<0.000000e+00> : vector<128xf32>
    %13 = vector.multi_reduction <add>, %12, %cst_7 [0] : vector<300x128xf32> to vector<128xf32>
    %14 = vector.shape_cast %13 : vector<128xf32> to vector<1x128xf32>
    %cst_8 = arith.constant 3.000000e+02 : f32
    %15 = vector.broadcast %cst_8 : f32 to vector<1x128xf32>
    %16 = arith.divf %14, %15 : vector<1x128xf32>
    %c0_9 = arith.constant 0 : index
    %c0_10 = arith.constant 0 : index
    %17 = vector.load %arg3[%c0_9, %c0_10] : memref<1x128xf32, #tpu.memory_space<vmem>>, vector<1x128xf32>
    %cst_11 = arith.constant 9.99999974E-6 : f32
    %18 = vector.broadcast %cst_11 : f32 to vector<1x128xf32>
    %19 = arith.addf %16, %18 : vector<1x128xf32>
    %20 = math.rsqrt %19 : vector<1x128xf32>
    %21 = arith.mulf %17, %20 : vector<1x128xf32>
    %c0_12 = arith.constant 0 : index
    %c0_13 = arith.constant 0 : index
    %22 = vector.load %arg4[%c0_12, %c0_13] : memref<1x128xf32, #tpu.memory_space<vmem>>, vector<1x128xf32>
    %23 = arith.mulf %9, %21 : vector<1x128xf32>
    %24 = arith.subf %22, %23 : vector<1x128xf32>
    %25 = vector.broadcast %21 : vector<1x128xf32> to vector<300x128xf32>
    %26 = arith.mulf %5, %25 : vector<300x128xf32>
    %27 = vector.broadcast %24 : vector<1x128xf32> to vector<300x128xf32>
    %28 = arith.addf %26, %27 : vector<300x128xf32>
    %cst_14 = arith.constant 0.00999999977 : f32
    %29 = vector.broadcast %cst_14 : f32 to vector<300x128xf32>
    %30 = arith.mulf %29, %28 : vector<300x128xf32>
    %31 = arith.maximumf %28, %30 : vector<300x128xf32>
    %c0_15 = arith.constant 0 : index
    %c0_16 = arith.constant 0 : index
    %32 = vector.load %arg5[%c0_15, %c0_16] : memref<1x128xf32, #tpu.memory_space<vmem>>, vector<1x128xf32>
    %33 = vector.broadcast %32 : vector<1x128xf32> to vector<300x128xf32>
    %34 = arith.mulf %31, %33 : vector<300x128xf32>
    %cst_17 = arith.constant dense<0.000000e+00> : vector<300xf32>
    %35 = vector.multi_reduction <add>, %34, %cst_17 [1] : vector<300x128xf32> to vector<300xf32>
    %36 = vector.shape_cast %35 : vector<300xf32> to vector<300x1xf32>
    %c0_18 = arith.constant 0 : index
    %c0_19 = arith.constant 0 : index
    %37 = memref.load %arg6[%c0_18, %c0_19] : memref<1x1xf32, #tpu.memory_space<smem>>
    %38 = vector.broadcast %37 : f32 to vector<300x1xf32>
    %39 = arith.addf %36, %38 : vector<300x1xf32>
    %c0_20 = arith.constant 0 : index
    %c0_21 = arith.constant 0 : index
    %40 = vector.load %arg7[%c0_20, %c0_21] : memref<300x1xf32, #tpu.memory_space<vmem>>, vector<300x1xf32>
    tpu.vector_store %arg7[%c0_20, %c0_21], %39 {strides = array<i32>} : memref<300x1xf32, #tpu.memory_space<vmem>>, vector<300x1xf32>,
    return
  }
}

</mosaic_0001>

<llo_original>
// kernel: tpu_custom_call.1
$region0: #{tpu_custom_call.1}
  #allocation0 [shape = 'u32[]', space=smem, size = 0x4, offset = 0x4, fixed_abs, tag = 'smem constant byte address 0x4 - core index']
  #allocation1 [shape = 'u32[144,128]{1,0:T(1,128)}', space=vmem, size = 0x12000, scoped, tag = 'internal scratch']
  #allocation2 [shape = 'f32[1,1]{1,0:T(1,128)S(6)}', space=smem, size = 0x200, scoped, tag = 'scoped memory for tpu_custom_call.1']
  %s0 = inlined_call_operand.vmem [shape: f32[300,32], index: 0, kind: input, shape index: {}]
  %s1 = inlined_call_operand.vmem [shape: f32[32,128], index: 1, kind: input, shape index: {}]
  %s2 = inlined_call_operand.vmem [shape: f32[1,128], index: 2, kind: input, shape index: {}]
  %s3 = inlined_call_operand.vmem [shape: f32[1,128], index: 3, kind: input, shape index: {}]
  %s4 = inlined_call_operand.vmem [shape: f32[1,128], index: 4, kind: input, shape index: {}]
  %s5 = inlined_call_operand.vmem [shape: f32[1,128], index: 5, kind: input, shape index: {}]
  %s6 = inlined_call_operand.<no memory space> [shape: f32[1,1], index: 6, kind: input, shape index: {}]
  %s7 = inlined_call_operand.vmem [shape: f32[300,1], index: 7, kind: output, shape index: {}]
  %s8 = sld [smem:[#allocation0]]
  $region38: #{tpu_custom_call.1} parent=0
    _
  %s10 = ssub.s32 1, %s8
  %s11 = scalar_select 0, %s10, %s8
  %12 = sst [smem:[#allocation2]] %s6
  // Predicated region
  $region2: #{tpu_custom_call.1} parent=0 // pred_check
    _
  $region3: #{tpu_custom_call.1} parent=0 // pred_check_branch
    %14 = sbr.rel (0) target = $region5
  $region4: #{tpu_custom_call.1} parent=0 // pred_region
    _
  $region5: #{tpu_custom_call.1} parent=0 // pred_fallthru
    _
  // Predicated region
  $region6: #{tpu_custom_call.1} parent=0 // pred_check
    _
  $region7: #{tpu_custom_call.1} parent=0 // pred_check_branch
    %16 = sbr.rel (0) target = $region9
  $region8: #{tpu_custom_call.1} parent=0 // pred_region
    _
  $region9: #{tpu_custom_call.1} parent=0 // pred_fallthru
    _
  // Predicated region
  $region10: #{tpu_custom_call.1} parent=0 // pred_check
    _
  $region11: #{tpu_custom_call.1} parent=0 // pred_check_branch
    %18 = sbr.rel (0) target = $region13
  $region12: #{tpu_custom_call.1} parent=0 // pred_region
    _
  $region13: #{tpu_custom_call.1} parent=0 // pred_fallthru
    _
  // Predicated region
  $region14: #{tpu_custom_call.1} parent=0 // pred_check
    _
  $region15: #{tpu_custom_call.1} parent=0 // pred_check_branch
    %20 = sbr.rel (0) target = $region17
  $region16: #{tpu_custom_call.1} parent=0 // pred_region
    _
  $region17: #{tpu_custom_call.1} parent=0 // pred_fallthru
    _
  // Predicated region
  $region18: #{tpu_custom_call.1} parent=0 // pred_check
    _
  $region19: #{tpu_custom_call.1} parent=0 // pred_check_branch
    %22 = sbr.rel (0) target = $region21
  $region20: #{tpu_custom_call.1} parent=0 // pred_region
    _
  $region21: #{tpu_custom_call.1} parent=0 // pred_fallthru
    _
  // Predicated region
  $region22: #{tpu_custom_call.1} parent=0 // pred_check
    _
  $region23: #{tpu_custom_call.1} parent=0 // pred_check_branch
    %24 = sbr.rel (0) target = $region25
  $region24: #{tpu_custom_call.1} parent=0 // pred_region
    _
  $region25: #{tpu_custom_call.1} parent=0 // pred_fallthru
    _
  // Predicated region
  $region26: #{tpu_custom_call.1} parent=0 // pred_check
    _
  $region27: #{tpu_custom_call.1} parent=0 // pred_check_branch
    %26 = sbr.rel (0) target = $region29
  $region28: #{tpu_custom_call.1} parent=0 // pred_region
    _
  $region29: #{tpu_custom_call.1} parent=0 // pred_fallthru
    _
  %v27 = vld [vmem:[%s0] sm:$0xff]
  %v28 = vld [vmem:[%s0 + $0x8] sm:$0xff]
  %v29 = vld [vmem:[%s0 + $0x10] sm:$0xff]
  %v30 = vld [vmem:[%s0 + $0x18] sm:$0xff]
  %v31 = vld [vmem:[%s0 + $0x20] sm:$0xff]
  %v32 = vld [vmem:[%s0 + $0x28] sm:$0xff]
  %v33 = vld [vmem:[%s0 + $0x30] sm:$0xff]
  %v34 = vld [vmem:[%s0 + $0x38] sm:$0xff]
  %v35 = vld [vmem:[%s0 + $0x40] sm:$0xff]
  %v36 = vld [vmem:[%s0 + $0x48] sm:$0xff]
  %v37 = vld [vmem:[%s0 + $0x50] sm:$0xff]
  %v38 = vld [vmem:[%s0 + $0x58] sm:$0xff]
  %v39 = vld [vmem:[%s0 + $0x60] sm:$0xff]
  %v40 = vld [vmem:[%s0 + $0x68] sm:$0xff]
  %v41 = vld [vmem:[%s0 + $0x70] sm:$0xff]
  %v42 = vld [vmem:[%s0 + $0x78] sm:$0xff]
  %v43 = vld [vmem:[%s0 + $0x80] sm:$0xff]
  %v44 = vld [vmem:[%s0 + $0x88] sm:$0xff]
  %v45 = vld [vmem:[%s0 + $0x90] sm:$0xff]
  %v46 = vld [vmem:[%s0 + $0x98] sm:$0xff]
  %v47 = vld [vmem:[%s0 + $0xa0] sm:$0xff]
  %v48 = vld [vmem:[%s0 + $0xa8] sm:$0xff]
  %v49 = vld [vmem:[%s0 + $0xb0] sm:$0xff]
  %v50 = vld [vmem:[%s0 + $0xb8] sm:$0xff]
  %v51 = vld [vmem:[%s0 + $0xc0] sm:$0xff]
  %v52 = vld [vmem:[%s0 + $0xc8] sm:$0xff]
  %v53 = vld [vmem:[%s0 + $0xd0] sm:$0xff]
  %v54 = vld [vmem:[%s0 + $0xd8] sm:$0xff]
  %v55 = vld [vmem:[%s0 + $0xe0] sm:$0xff]
  %v56 = vld [vmem:[%s0 + $0xe8] sm:$0xff]
  %v57 = vld [vmem:[%s0 + $0xf0] sm:$0xff]
  %v58 = vld [vmem:[%s0 + $0xf8] sm:$0xff]
  %v59 = vld [vmem:[%s0 + $0x100] sm:$0xff]
  %v60 = vld [vmem:[%s0 + $0x108] sm:$0xff]
  %v61 = vld [vmem:[%s0 + $0x110] sm:$0xff]
  %v62 = vld [vmem:[%s0 + $0x118] sm:$0xff]
  %v63 = vld [vmem:[%s0 + $0x120] sm:$0xff]
  %v64 = vld [vmem:[%s0 + $0x128] sm:$0xf]
  %v65 = vld [vmem:[%s1] sm:$0xff]
  %v66 = vld [vmem:[%s1 + $0x8] sm:$0xff]
  %v67 = vld [vmem:[%s1 + $0x10] sm:$0xff]
  %v68 = vld [vmem:[%s1 + $0x18] sm:$0xff]
  %v69 = vld [vmem:[%s2] sm:$0x1]
  %v71 = vlaneseq
  %v72 = vshrl.u32 %v71, 7
  %v73 = vsub.s32 0, %v72
  %v74 = vrot.slane %v69, %v73
  %vm76 = vcmask 261120
  %v78 = vsel %vm76, %v27, 0
  %v81 = vsel %vm76, %v28, 0
  %v84 = vsel %vm76, %v29, 0
  %v87 = vsel %vm76, %v30, 0
  %v90 = vsel %vm76, %v31, 0
  %v93 = vsel %vm76, %v32, 0
  %v96 = vsel %vm76, %v33, 0
  %v99 = vsel %vm76, %v34, 0
  %v102 = vsel %vm76, %v35, 0
  %v105 = vsel %vm76, %v36, 0
  %v108 = vsel %vm76, %v37, 0
  %v111 = vsel %vm76, %v38, 0
  %v114 = vsel %vm76, %v39, 0
  %v117 = vsel %vm76, %v40, 0
  %v120 = vsel %vm76, %v41, 0
  %v123 = vsel %vm76, %v42, 0
  %v126 = vsel %vm76, %v43, 0
  %v129 = vsel %vm76, %v44, 0
  %v132 = vsel %vm76, %v45, 0
  %v135 = vsel %vm76, %v46, 0
  %v138 = vsel %vm76, %v47, 0
  %v141 = vsel %vm76, %v48, 0
  %v144 = vsel %vm76, %v49, 0
  %v147 = vsel %vm76, %v50, 0
  %v150 = vsel %vm76, %v51, 0
  %v153 = vsel %vm76, %v52, 0
  %v156 = vsel %vm76, %v53, 0
  %v159 = vsel %vm76, %v54, 0
  %v162 = vsel %vm76, %v55, 0
  %v165 = vsel %vm76, %v56, 0
  %v168 = vsel %vm76, %v57, 0
  %v171 = vsel %vm76, %v58, 0
  %v174 = vsel %vm76, %v59, 0
  %v177 = vsel %vm76, %v60, 0
  %v180 = vsel %vm76, %v61, 0
  %v183 = vsel %vm76, %v62, 0
  %v186 = vsel %vm76, %v63, 0
  %v189 = vsel %vm76, %v64, 0
  %191 = vmatprep.subr.mxu0 0.0
  %192 = vmatpush1.msra.mxu0 0.0
  %193 = vmatprep.subr.mxu0 0.0
  %194 = vmatpush1.msra.mxu0 0.0
  %195 = vmatprep.subr.mxu0 0.0
  %196 = vmatpush1.msra.mxu0 0.0
  %197 = vmatprep.subr.mxu0 0.0
  %198 = vmatpush1.msra.mxu0 0.0
  %199 = vmatprep.subr.mxu0 0.0
  %200 = vmatpush1.msra.mxu0 0.0
  %201 = vmatprep.subr.mxu0 0.0
  %202 = vmatpush1.msra.mxu0 0.0
  %203 = vmatprep.subr.mxu0 0.0
  %204 = vmatpush1.msra.mxu0 0.0
  %205 = vmatprep.subr.mxu0 0.0
  %206 = vmatpush1.msra.mxu0 0.0
  %207 = vmatprep.subr.mxu0 0.0
  %208 = vmatpush1.msra.mxu0 0.0
  %209 = vmatprep.subr.mxu0 0.0
  %210 = vmatpush1.msra.mxu0 0.0
  %211 = vmatprep.subr.mxu0 0.0
  %212 = vmatpush1.msra.mxu0 0.0
  %213 = vmatprep.subr.mxu0 0.0
  %214 = vmatpush1.msra.mxu0 0.0
  %215 = vmatprep.subr.mxu0 0.0
  %216 = vmatpush1.msra.mxu0 %v68
  %217 = vmatprep.subr.mxu0 0.0
  %218 = vmatpush1.msra.mxu0 %v67
  %219 = vmatprep.subr.mxu0 0.0
  %220 = vmatpush1.msra.mxu0 %v66
  %221 = vmatprep.subr.mxu0 0.0
  %222 = vmatpush1.msra.mxu0 %v65
  %223 = vmatprep.subr.mxu0 0.0
  %224 = vmatpush2.msra.mxu0 0.0
  %225 = vmatprep.subr.mxu0 0.0
  %226 = vmatpush2.msra.mxu0 0.0
  %227 = vmatprep.subr.mxu0 0.0
  %228 = vmatpush2.msra.mxu0 0.0
  %229 = vmatprep.subr.mxu0 0.0
  %230 = vmatpush2.msra.mxu0 0.0
  %231 = vmatprep.subr.mxu0 0.0
  %232 = vmatpush2.msra.mxu0 0.0
  %233 = vmatprep.subr.mxu0 0.0
  %234 = vmatpush2.msra.mxu0 0.0
  %235 = vmatprep.subr.mxu0 0.0
  %236 = vmatpush2.msra.mxu0 0.0
  %237 = vmatprep.subr.mxu0 0.0
  %238 = vmatpush2.msra.mxu0 0.0
  %239 = vmatprep.subr.mxu0 0.0
  %240 = vmatpush2.msra.mxu0 0.0
  %241 = vmatprep.subr.mxu0 0.0
  %242 = vmatpush2.msra.mxu0 0.0
  %243 = vmatprep.subr.mxu0 0.0
  %244 = vmatpush2.msra.mxu0 0.0
  %245 = vmatprep.subr.mxu0 0.0
  %246 = vmatpush2.msra.mxu0 0.0
  %247 = vmatprep.subr.mxu0 0.0
  %248 = vmatpush2.msra.mxu0 0.0
  %249 = vmatprep.subr.mxu0 0.0
  %250 = vmatpush2.msra.mxu0 0.0
  %251 = vmatprep.subr.mxu0 0.0
  %252 = vmatpush2.msra.mxu0 0.0
  %253 = vmatprep.subr.mxu0 0.0
  %254 = vmatpush2.msra.mxu0 0.0
  %255 = vmatprep.mubr.f32.mxu0 0.0
  %256 = vmatmul.mubr.f32.gmra.mxu0 %v78
  %v257 = vpop.f32.mrf.mxu0
  %v258 = vadd.f32 %v74, %v257
  %v259 = vpop.f32.mrf.mxu0
  %260 = vmatprep.mubr.f32.mxu0 0.0
  %261 = vmatmul.mubr.f32.gmra.mxu0 %v81
  %v262 = vpop.f32.mrf.mxu0
  %v263 = vadd.f32 %v74, %v262
  %v264 = vpop.f32.mrf.mxu0
  %265 = vmatprep.mubr.f32.mxu0 0.0
  %266 = vmatmul.mubr.f32.gmra.mxu0 %v84
  %v267 = vpop.f32.mrf.mxu0
  %v268 = vadd.f32 %v74, %v267
  %v269 = vpop.f32.mrf.mxu0
  %270 = vmatprep.mubr.f32.mxu0 0.0
  %271 = vmatmul.mubr.f32.gmra.mxu0 %v87
  %v272 = vpop.f32.mrf.mxu0
  %v273 = vadd.f32 %v74, %v272
  %v274 = vpop.f32.mrf.mxu0
  %275 = vmatprep.mubr.f32.mxu0 0.0
  %276 = vmatmul.mubr.f32.gmra.mxu0 %v90
  %v277 = vpop.f32.mrf.mxu0
  %v278 = vadd.f32 %v74, %v277
  %v279 = vpop.f32.mrf.mxu0
  %280 = vmatprep.mubr.f32.mxu0 0.0
  %281 = vmatmul.mubr.f32.gmra.mxu0 %v93
  %v282 = vpop.f32.mrf.mxu0
  %v283 = vadd.f32 %v74, %v282
  %v284 = vpop.f32.mrf.mxu0
  %285 = vmatprep.mubr.f32.mxu0 0.0
  %286 = vmatmul.mubr.f32.gmra.mxu0 %v96
  %v287 = vpop.f32.mrf.mxu0
  %v288 = vadd.f32 %v74, %v287
  %v289 = vpop.f32.mrf.mxu0
  %290 = vmatprep.mubr.f32.mxu0 0.0
  %291 = vmatmul.mubr.f32.gmra.mxu0 %v99
  %v292 = vpop.f32.mrf.mxu0
  %v293 = vadd.f32 %v74, %v292
  %v294 = vpop.f32.mrf.mxu0
  %295 = vmatprep.mubr.f32.mxu0 0.0
  %296 = vmatmul.mubr.f32.gmra.mxu0 %v102
  %v297 = vpop.f32.mrf.mxu0
  %v298 = vadd.f32 %v74, %v297
  %v299 = vpop.f32.mrf.mxu0
  %300 = vmatprep.mubr.f32.mxu0 0.0
  %301 = vmatmul.mubr.f32.gmra.mxu0 %v105
  %v302 = vpop.f32.mrf.mxu0
  %v303 = vadd.f32 %v74, %v302
  %v304 = vpop.f32.mrf.mxu0
  %305 = vmatprep.mubr.f32.mxu0 0.0
  %306 = vmatmul.mubr.f32.gmra.mxu0 %v108
  %v307 = vpop.f32.mrf.mxu0
  %v308 = vadd.f32 %v74, %v307
  %v309 = vpop.f32.mrf.mxu0
  %310 = vmatprep.mubr.f32.mxu0 0.0
  %311 = vmatmul.mubr.f32.gmra.mxu0 %v111
  %v312 = vpop.f32.mrf.mxu0
  %v313 = vadd.f32 %v74, %v312
  %v314 = vpop.f32.mrf.mxu0
  %315 = vmatprep.mubr.f32.mxu0 0.0
  %316 = vmatmul.mubr.f32.gmra.mxu0 %v114
  %v317 = vpop.f32.mrf.mxu0
  %v318 = vadd.f32 %v74, %v317
  %v319 = vpop.f32.mrf.mxu0
  %320 = vmatprep.mubr.f32.mxu0 0.0
  %321 = vmatmul.mubr.f32.gmra.mxu0 %v117
  %v322 = vpop.f32.mrf.mxu0
  %v323 = vadd.f32 %v74, %v322
  %v324 = vpop.f32.mrf.mxu0
  %325 = vmatprep.mubr.f32.mxu0 0.0
  %326 = vmatmul.mubr.f32.gmra.mxu0 %v120
  %v327 = vpop.f32.mrf.mxu0
  %v328 = vadd.f32 %v74, %v327
  %v329 = vpop.f32.mrf.mxu0
  %330 = vmatprep.mubr.f32.mxu0 0.0
  %331 = vmatmul.mubr.f32.gmra.mxu0 %v123
  %v332 = vpop.f32.mrf.mxu0
  %v333 = vadd.f32 %v74, %v332
  %v334 = vpop.f32.mrf.mxu0
  %335 = vmatprep.mubr.f32.mxu0 0.0
  %336 = vmatmul.mubr.f32.gmra.mxu0 %v126
  %v337 = vpop.f32.mrf.mxu0
  %v338 = vadd.f32 %v74, %v337
  %v339 = vpop.f32.mrf.mxu0
  %340 = vmatprep.mubr.f32.mxu0 0.0
  %341 = vmatmul.mubr.f32.gmra.mxu0 %v129
  %v342 = vpop.f32.mrf.mxu0
  %v343 = vadd.f32 %v74, %v342
  %v344 = vpop.f32.mrf.mxu0
  %345 = vmatprep.mubr.f32.mxu0 0.0
  %346 = vmatmul.mubr.f32.gmra.mxu0 %v132
  %v347 = vpop.f32.mrf.mxu0
  %v348 = vadd.f32 %v74, %v347
  %v349 = vpop.f32.mrf.mxu0
  %350 = vmatprep.mubr.f32.mxu0 0.0
  %351 = vmatmul.mubr.f32.gmra.mxu0 %v135
  %v352 = vpop.f32.mrf.mxu0
  %v353 = vadd.f32 %v74, %v352
  %v354 = vpop.f32.mrf.mxu0
  %355 = vmatprep.mubr.f32.mxu0 0.0
  %356 = vmatmul.mubr.f32.gmra.mxu0 %v138
  %v357 = vpop.f32.mrf.mxu0
  %v358 = vadd.f32 %v74, %v357
  %v359 = vpop.f32.mrf.mxu0
  %360 = vmatprep.mubr.f32.mxu0 0.0
  %361 = vmatmul.mubr.f32.gmra.mxu0 %v141
  %v362 = vpop.f32.mrf.mxu0
  %v363 = vadd.f32 %v74, %v362
  %v364 = vpop.f32.mrf.mxu0
  %365 = vmatprep.mubr.f32.mxu0 0.0
  %366 = vmatmul.mubr.f32.gmra.mxu0 %v144
  %v367 = vpop.f32.mrf.mxu0
  %v368 = vadd.f32 %v74, %v367
  %v369 = vpop.f32.mrf.mxu0
  %370 = vmatprep.mubr.f32.mxu0 0.0
  %371 = vmatmul.mubr.f32.gmra.mxu0 %v147
  %v372 = vpop.f32.mrf.mxu0
  %v373 = vadd.f32 %v74, %v372
  %v374 = vpop.f32.mrf.mxu0
  %375 = vmatprep.mubr.f32.mxu0 0.0
  %376 = vmatmul.mubr.f32.gmra.mxu0 %v150
  %v377 = vpop.f32.mrf.mxu0
  %v378 = vadd.f32 %v74, %v377
  %v379 = vpop.f32.mrf.mxu0
  %380 = vmatprep.mubr.f32.mxu0 0.0
  %381 = vmatmul.mubr.f32.gmra.mxu0 %v153
  %v382 = vpop.f32.mrf.mxu0
  %v383 = vadd.f32 %v74, %v382
  %v384 = vpop.f32.mrf.mxu0
  %385 = vmatprep.mubr.f32.mxu0 0.0
  %386 = vmatmul.mubr.f32.gmra.mxu0 %v156
  %v387 = vpop.f32.mrf.mxu0
  %v388 = vadd.f32 %v74, %v387
  %v389 = vpop.f32.mrf.mxu0
  %390 = vmatprep.mubr.f32.mxu0 0.0
  %391 = vmatmul.mubr.f32.gmra.mxu0 %v159
  %v392 = vpop.f32.mrf.mxu0
  %v393 = vadd.f32 %v74, %v392
  %v394 = vpop.f32.mrf.mxu0
  %395 = vmatprep.mubr.f32.mxu0 0.0
  %396 = vmatmul.mubr.f32.gmra.mxu0 %v162
  %v397 = vpop.f32.mrf.mxu0
  %v398 = vadd.f32 %v74, %v397
  %v399 = vpop.f32.mrf.mxu0
  %400 = vmatprep.mubr.f32.mxu0 0.0
  %401 = vmatmul.mubr.f32.gmra.mxu0 %v165
  %v402 = vpop.f32.mrf.mxu0
  %v403 = vadd.f32 %v74, %v402
  %v404 = vpop.f32.mrf.mxu0
  %405 = vmatprep.mubr.f32.mxu0 0.0
  %406 = vmatmul.mubr.f32.gmra.mxu0 %v168
  %v407 = vpop.f32.mrf.mxu0
  %v408 = vadd.f32 %v74, %v407
  %v409 = vpop.f32.mrf.mxu0
  %410 = vmatprep.mubr.f32.mxu0 0.0
  %411 = vmatmul.mubr.f32.gmra.mxu0 %v171
  %v412 = vpop.f32.mrf.mxu0
  %v413 = vadd.f32 %v74, %v412
  %v414 = vpop.f32.mrf.mxu0
  %415 = vmatprep.mubr.f32.mxu0 0.0
  %416 = vmatmul.mubr.f32.gmra.mxu0 %v174
  %v417 = vpop.f32.mrf.mxu0
  %v418 = vadd.f32 %v74, %v417
  %v419 = vpop.f32.mrf.mxu0
  %420 = vmatprep.mubr.f32.mxu0 0.0
  %421 = vmatmul.mubr.f32.gmra.mxu0 %v177
  %v422 = vpop.f32.mrf.mxu0
  %v423 = vadd.f32 %v74, %v422
  %v424 = vpop.f32.mrf.mxu0
  %425 = vmatprep.mubr.f32.mxu0 0.0
  %426 = vmatmul.mubr.f32.gmra.mxu0 %v180
  %v427 = vpop.f32.mrf.mxu0
  %v428 = vadd.f32 %v74, %v427
  %v429 = vpop.f32.mrf.mxu0
  %430 = vmatprep.mubr.f32.mxu0 0.0
  %431 = vmatmul.mubr.f32.gmra.mxu0 %v183
  %v432 = vpop.f32.mrf.mxu0
  %v433 = vadd.f32 %v74, %v432
  %v434 = vpop.f32.mrf.mxu0
  %435 = vmatprep.mubr.f32.mxu0 0.0
  %436 = vmatmul.mubr.f32.gmra.mxu0 %v186
  %v437 = vpop.f32.mrf.mxu0
  %v438 = vadd.f32 %v74, %v437
  %v439 = vpop.f32.mrf.mxu0
  %440 = vmatprep.mubr.f32.mxu0 0.0
  %441 = vmatmul.mubr.f32.gmra.mxu0 %v189
  %v442 = vpop.f32.mrf.mxu0
  %v443 = vadd.f32 %v74, %v442
  %v444 = vpop.f32.mrf.mxu0
  %445 = vdwg.mxu0
  %v446 = vadd.f32 %v258, %v263
  %v447 = vadd.f32 %v446, %v268
  %v448 = vadd.f32 %v447, %v273
  %v449 = vadd.f32 %v448, %v278
  %v450 = vadd.f32 %v449, %v283
  %v451 = vadd.f32 %v450, %v288
  %v452 = vadd.f32 %v451, %v293
  %v453 = vadd.f32 %v452, %v298
  %v454 = vadd.f32 %v453, %v303
  %v455 = vadd.f32 %v454, %v308
  %v456 = vadd.f32 %v455, %v313
  %v457 = vadd.f32 %v456, %v318
  %v458 = vadd.f32 %v457, %v323
  %v459 = vadd.f32 %v458, %v328
  %v460 = vadd.f32 %v459, %v333
  %v461 = vadd.f32 %v460, %v338
  %v462 = vadd.f32 %v461, %v343
  %v463 = vadd.f32 %v462, %v348
  %v464 = vadd.f32 %v463, %v353
  %v465 = vadd.f32 %v464, %v358
  %v466 = vadd.f32 %v465, %v363
  %v467 = vadd.f32 %v466, %v368
  %v468 = vadd.f32 %v467, %v373
  %v469 = vadd.f32 %v468, %v378
  %v470 = vadd.f32 %v469, %v383
  %v471 = vadd.f32 %v470, %v388
  %v472 = vadd.f32 %v471, %v393
  %v473 = vadd.f32 %v472, %v398
  %v474 = vadd.f32 %v473, %v403
  %v475 = vadd.f32 %v474, %v408
  %v476 = vadd.f32 %v475, %v413
  %v477 = vadd.f32 %v476, %v418
  %v478 = vadd.f32 %v477, %v423
  %v479 = vadd.f32 %v478, %v428
  %v480 = vadd.f32 %v479, %v433
  %v481 = vadd.f32 %v480, %v438
  %vm482 = vcmask 1043456
  %v483 = vsel %vm482, %v443, 0.0
  %v484 = vadd.f32 %v481, %v483
  %v485 = vrot.slane %v484, 4
  %v486 = vadd.f32 %v484, %v485
  %v487 = vrot.slane %v486, 2
  %v488 = vadd.f32 %v486, %v487
  %v489 = vrot.slane %v488, 1
  %v490 = vadd.f32 %v488, %v489
  %v491 = vrcp.pop 300.0
  %v492 = vmul.f32 %v490, %v491
  %v493 = vsub.f32 %v258, %v492
  %v494 = vsub.f32 %v263, %v492
  %v495 = vsub.f32 %v268, %v492
  %v496 = vsub.f32 %v273, %v492
  %v497 = vsub.f32 %v278, %v492
  %v498 = vsub.f32 %v283, %v492
  %v499 = vsub.f32 %v288, %v492
  %v500 = vsub.f32 %v293, %v492
  %v501 = vsub.f32 %v298, %v492
  %v502 = vsub.f32 %v303, %v492
  %v503 = vsub.f32 %v308, %v492
  %v504 = vsub.f32 %v313, %v492
  %v505 = vsub.f32 %v318, %v492
  %v506 = vsub.f32 %v323, %v492
  %v507 = vsub.f32 %v328, %v492
  %v508 = vsub.f32 %v333, %v492
  %v509 = vsub.f32 %v338, %v492
  %v510 = vsub.f32 %v343, %v492
  %v511 = vsub.f32 %v348, %v492
  %v512 = vsub.f32 %v353, %v492
  %v513 = vsub.f32 %v358, %v492
  %v514 = vsub.f32 %v363, %v492
  %v515 = vsub.f32 %v368, %v492
  %v516 = vsub.f32 %v373, %v492
  %v517 = vsub.f32 %v378, %v492
  %v518 = vsub.f32 %v383, %v492
  %v519 = vsub.f32 %v388, %v492
  %v520 = vsub.f32 %v393, %v492
  %v521 = vsub.f32 %v398, %v492
  %v522 = vsub.f32 %v403, %v492
  %v523 = vsub.f32 %v408, %v492
  %v524 = vsub.f32 %v413, %v492
  %v525 = vsub.f32 %v418, %v492
  %v526 = vsub.f32 %v423, %v492
  %v527 = vsub.f32 %v428, %v492
  %v528 = vsub.f32 %v433, %v492
  %v529 = vsub.f32 %v438, %v492
  %v530 = vsub.f32 %v443, %v492
  %v531 = vmul.f32 %v493, %v493
  %v532 = vmul.f32 %v494, %v494
  %v533 = vmul.f32 %v495, %v495
  %v534 = vmul.f32 %v496, %v496
  %v535 = vmul.f32 %v497, %v497
  %v536 = vmul.f32 %v498, %v498
  %v537 = vmul.f32 %v499, %v499
  %v538 = vmul.f32 %v500, %v500
  %v539 = vmul.f32 %v501, %v501
  %v540 = vmul.f32 %v502, %v502
  %v541 = vmul.f32 %v503, %v503
  %v542 = vmul.f32 %v504, %v504
  %v543 = vmul.f32 %v505, %v505
  %v544 = vmul.f32 %v506, %v506
  %v545 = vmul.f32 %v507, %v507
  %v546 = vmul.f32 %v508, %v508
  %v547 = vmul.f32 %v509, %v509
  %v548 = vmul.f32 %v510, %v510
  %v549 = vmul.f32 %v511, %v511
  %v550 = vmul.f32 %v512, %v512
  %v551 = vmul.f32 %v513, %v513
  %v552 = vmul.f32 %v514, %v514
  %v553 = vmul.f32 %v515, %v515
  %v554 = vmul.f32 %v516, %v516
  %v555 = vmul.f32 %v517, %v517
  %v556 = vmul.f32 %v518, %v518
  %v557 = vmul.f32 %v519, %v519
  %v558 = vmul.f32 %v520, %v520
  %v559 = vmul.f32 %v521, %v521
  %v560 = vmul.f32 %v522, %v522
  %v561 = vmul.f32 %v523, %v523
  %v562 = vmul.f32 %v524, %v524
  %v563 = vmul.f32 %v525, %v525
  %v564 = vmul.f32 %v526, %v526
  %v565 = vmul.f32 %v527, %v527
  %v566 = vmul.f32 %v528, %v528
  %v567 = vmul.f32 %v529, %v529
  %v568 = vmul.f32 %v530, %v530
  %v569 = vadd.f32 %v531, %v532
  %v570 = vadd.f32 %v569, %v533
  %v571 = vadd.f32 %v570, %v534
  %v572 = vadd.f32 %v571, %v535
  %v573 = vadd.f32 %v572, %v536
  %v574 = vadd.f32 %v573, %v537
  %v575 = vadd.f32 %v574, %v538
  %v576 = vadd.f32 %v575, %v539
  %v577 = vadd.f32 %v576, %v540
  %v578 = vadd.f32 %v577, %v541
  %v579 = vadd.f32 %v578, %v542
  %v580 = vadd.f32 %v579, %v543
  %v581 = vadd.f32 %v580, %v544
  %v582 = vadd.f32 %v581, %v545
  %v583 = vadd.f32 %v582, %v546
  %v584 = vadd.f32 %v583, %v547
  %v585 = vadd.f32 %v584, %v548
  %v586 = vadd.f32 %v585, %v549
  %v587 = vadd.f32 %v586, %v550
  %v588 = vadd.f32 %v587, %v551
  %v589 = vadd.f32 %v588, %v552
  %v590 = vadd.f32 %v589, %v553
  %v591 = vadd.f32 %v590, %v554
  %v592 = vadd.f32 %v591, %v555
  %v593 = vadd.f32 %v592, %v556
  %v594 = vadd.f32 %v593, %v557
  %v595 = vadd.f32 %v594, %v558
  %v596 = vadd.f32 %v595, %v559
  %v597 = vadd.f32 %v596, %v560
  %v598 = vadd.f32 %v597, %v561
  %v599 = vadd.f32 %v598, %v562
  %v600 = vadd.f32 %v599, %v563
  %v601 = vadd.f32 %v600, %v564
  %v602 = vadd.f32 %v601, %v565
  %v603 = vadd.f32 %v602, %v566
  %v604 = vadd.f32 %v603, %v567
  %v605 = vsel %vm482, %v568, 0.0
  %v606 = vadd.f32 %v604, %v605
  %v607 = vrot.slane %v606, 4
  %v608 = vadd.f32 %v606, %v607
  %v609 = vrot.slane %v608, 2
  %v610 = vadd.f32 %v608, %v609
  %v611 = vrot.slane %v610, 1
  %v612 = vadd.f32 %v610, %v611
  %v613 = vmul.f32 %v612, %v491
  %v614 = vld [vmem:[%s3] sm:$0x1]
  %v615 = vadd.f32 %v613, 1e-05
  %v616 = vrsqrt.pop %v615
  %v617 = vmul.f32 %v614, %v616
  %v618 = vld [vmem:[%s4] sm:$0x1]
  %v619 = vmul.f32 %v492, %v617
  %v620 = vsub.f32 %v618, %v619
  %v622 = vlaneseq
  %v623 = vshrl.u32 %v622, 7
  %v624 = vsub.s32 0, %v623
  %v625 = vrot.slane %v617, %v624
  %v627 = vmul.f32 %v258, %v625
  %v628 = vmul.f32 %v263, %v625
  %v629 = vmul.f32 %v268, %v625
  %v630 = vmul.f32 %v273, %v625
  %v631 = vmul.f32 %v278, %v625
  %v632 = vmul.f32 %v283, %v625
  %v633 = vmul.f32 %v288, %v625
  %v634 = vmul.f32 %v293, %v625
  %v635 = vmul.f32 %v298, %v625
  %v636 = vmul.f32 %v303, %v625
  %v637 = vmul.f32 %v308, %v625
  %v638 = vmul.f32 %v313, %v625
  %v639 = vmul.f32 %v318, %v625
  %v640 = vmul.f32 %v323, %v625
  %v641 = vmul.f32 %v328, %v625
  %v642 = vmul.f32 %v333, %v625
  %v643 = vmul.f32 %v338, %v625
  %v644 = vmul.f32 %v343, %v625
  %v645 = vmul.f32 %v348, %v625
  %v646 = vmul.f32 %v353, %v625
  %v647 = vmul.f32 %v358, %v625
  %v648 = vmul.f32 %v363, %v625
  %v649 = vmul.f32 %v368, %v625
  %v650 = vmul.f32 %v373, %v625
  %v651 = vmul.f32 %v378, %v625
  %v652 = vmul.f32 %v383, %v625
  %v653 = vmul.f32 %v388, %v625
  %v654 = vmul.f32 %v393, %v625
  %v655 = vmul.f32 %v398, %v625
  %v656 = vmul.f32 %v403, %v625
  %v657 = vmul.f32 %v408, %v625
  %v658 = vmul.f32 %v413, %v625
  %v659 = vmul.f32 %v418, %v625
  %v660 = vmul.f32 %v423, %v625
  %v661 = vmul.f32 %v428, %v625
  %v662 = vmul.f32 %v433, %v625
  %v663 = vmul.f32 %v438, %v625
  %v664 = vmul.f32 %v443, %v625
  %v666 = vlaneseq
  %v667 = vshrl.u32 %v666, 7
  %v668 = vsub.s32 0, %v667
  %v669 = vrot.slane %v620, %v668
  %v671 = vadd.f32 %v627, %v669
  %v672 = vadd.f32 %v628, %v669
  %v673 = vadd.f32 %v629, %v669
  %v674 = vadd.f32 %v630, %v669
  %v675 = vadd.f32 %v631, %v669
  %v676 = vadd.f32 %v632, %v669
  %v677 = vadd.f32 %v633, %v669
  %v678 = vadd.f32 %v634, %v669
  %v679 = vadd.f32 %v635, %v669
  %v680 = vadd.f32 %v636, %v669
  %v681 = vadd.f32 %v637, %v669
  %v682 = vadd.f32 %v638, %v669
  %v683 = vadd.f32 %v639, %v669
  %v684 = vadd.f32 %v640, %v669
  %v685 = vadd.f32 %v641, %v669
  %v686 = vadd.f32 %v642, %v669
  %v687 = vadd.f32 %v643, %v669
  %v688 = vadd.f32 %v644, %v669
  %v689 = vadd.f32 %v645, %v669
  %v690 = vadd.f32 %v646, %v669
  %v691 = vadd.f32 %v647, %v669
  %v692 = vadd.f32 %v648, %v669
  %v693 = vadd.f32 %v649, %v669
  %v694 = vadd.f32 %v650, %v669
  %v695 = vadd.f32 %v651, %v669
  %v696 = vadd.f32 %v652, %v669
  %v697 = vadd.f32 %v653, %v669
  %v698 = vadd.f32 %v654, %v669
  %v699 = vadd.f32 %v655, %v669
  %v700 = vadd.f32 %v656, %v669
  %v701 = vadd.f32 %v657, %v669
  %v702 = vadd.f32 %v658, %v669
  %v703 = vadd.f32 %v659, %v669
  %v704 = vadd.f32 %v660, %v669
  %v705 = vadd.f32 %v661, %v669
  %v706 = vadd.f32 %v662, %v669
  %v707 = vadd.f32 %v663, %v669
  %v708 = vadd.f32 %v664, %v669
  %v709 = vmul.f32 %v671, 0.01
  %v710 = vmul.f32 %v672, 0.01
  %v711 = vmul.f32 %v673, 0.01
  %v712 = vmul.f32 %v674, 0.01
  %v713 = vmul.f32 %v675, 0.01
  %v714 = vmul.f32 %v676, 0.01
  %v715 = vmul.f32 %v677, 0.01
  %v716 = vmul.f32 %v678, 0.01
  %v717 = vmul.f32 %v679, 0.01
  %v718 = vmul.f32 %v680, 0.01
  %v719 = vmul.f32 %v681, 0.01
  %v720 = vmul.f32 %v682, 0.01
  %v721 = vmul.f32 %v683, 0.01
  %v722 = vmul.f32 %v684, 0.01
  %v723 = vmul.f32 %v685, 0.01
  %v724 = vmul.f32 %v686, 0.01
  %v725 = vmul.f32 %v687, 0.01
  %v726 = vmul.f32 %v688, 0.01
  %v727 = vmul.f32 %v689, 0.01
  %v728 = vmul.f32 %v690, 0.01
  %v729 = vmul.f32 %v691, 0.01
  %v730 = vmul.f32 %v692, 0.01
  %v731 = vmul.f32 %v693, 0.01
  %v732 = vmul.f32 %v694, 0.01
  %v733 = vmul.f32 %v695, 0.01
  %v734 = vmul.f32 %v696, 0.01
  %v735 = vmul.f32 %v697, 0.01
  %v736 = vmul.f32 %v698, 0.01
  %v737 = vmul.f32 %v699, 0.01
  %v738 = vmul.f32 %v700, 0.01
  %v739 = vmul.f32 %v701, 0.01
  %v740 = vmul.f32 %v702, 0.01
  %v741 = vmul.f32 %v703, 0.01
  %v742 = vmul.f32 %v704, 0.01
  %v743 = vmul.f32 %v705, 0.01
  %v744 = vmul.f32 %v706, 0.01
  %v745 = vmul.f32 %v707, 0.01
  %v746 = vmul.f32 %v708, 0.01
  %v747 = vmax.f32 %v671, %v709
  %v748 = vmax.f32 %v672, %v710
  %v749 = vmax.f32 %v673, %v711
  %v750 = vmax.f32 %v674, %v712
  %v751 = vmax.f32 %v675, %v713
  %v752 = vmax.f32 %v676, %v714
  %v753 = vmax.f32 %v677, %v715
  %v754 = vmax.f32 %v678, %v716
  %v755 = vmax.f32 %v679, %v717
  %v756 = vmax.f32 %v680, %v718
  %v757 = vmax.f32 %v681, %v719
  %v758 = vmax.f32 %v682, %v720
  %v759 = vmax.f32 %v683, %v721
  %v760 = vmax.f32 %v684, %v722
  %v761 = vmax.f32 %v685, %v723
  %v762 = vmax.f32 %v686, %v724
  %v763 = vmax.f32 %v687, %v725
  %v764 = vmax.f32 %v688, %v726
  %v765 = vmax.f32 %v689, %v727
  %v766 = vmax.f32 %v690, %v728
  %v767 = vmax.f32 %v691, %v729
  %v768 = vmax.f32 %v692, %v730
  %v769 = vmax.f32 %v693, %v731
  %v770 = vmax.f32 %v694, %v732
  %v771 = vmax.f32 %v695, %v733
  %v772 = vmax.f32 %v696, %v734
  %v773 = vmax.f32 %v697, %v735
  %v774 = vmax.f32 %v698, %v736
  %v775 = vmax.f32 %v699, %v737
  %v776 = vmax.f32 %v700, %v738
  %v777 = vmax.f32 %v701, %v739
  %v778 = vmax.f32 %v702, %v740
  %v779 = vmax.f32 %v703, %v741
  %v780 = vmax.f32 %v704, %v742
  %v781 = vmax.f32 %v705, %v743
  %v782 = vmax.f32 %v706, %v744
  %v783 = vmax.f32 %v707, %v745
  %v784 = vmax.f32 %v708, %v746
  %v785 = vld [vmem:[%s5] sm:$0x1]
  %v787 = vlaneseq
  %v788 = vshrl.u32 %v787, 7
  %v789 = vsub.s32 0, %v788
  %v790 = vrot.slane %v785, %v789
  %v792 = vmul.f32 %v747, %v790
  %v793 = vmul.f32 %v748, %v790
  %v794 = vmul.f32 %v749, %v790
  %v795 = vmul.f32 %v750, %v790
  %v796 = vmul.f32 %v751, %v790
  %v797 = vmul.f32 %v752, %v790
  %v798 = vmul.f32 %v753, %v790
  %v799 = vmul.f32 %v754, %v790
  %v800 = vmul.f32 %v755, %v790
  %v801 = vmul.f32 %v756, %v790
  %v802 = vmul.f32 %v757, %v790
  %v803 = vmul.f32 %v758, %v790
  %v804 = vmul.f32 %v759, %v790
  %v805 = vmul.f32 %v760, %v790
  %v806 = vmul.f32 %v761, %v790
  %v807 = vmul.f32 %v762, %v790
  %v808 = vmul.f32 %v763, %v790
  %v809 = vmul.f32 %v764, %v790
  %v810 = vmul.f32 %v765, %v790
  %v811 = vmul.f32 %v766, %v790
  %v812 = vmul.f32 %v767, %v790
  %v813 = vmul.f32 %v768, %v790
  %v814 = vmul.f32 %v769, %v790
  %v815 = vmul.f32 %v770, %v790
  %v816 = vmul.f32 %v771, %v790
  %v817 = vmul.f32 %v772, %v790
  %v818 = vmul.f32 %v773, %v790
  %v819 = vmul.f32 %v774, %v790
  %v820 = vmul.f32 %v775, %v790
  %v821 = vmul.f32 %v776, %v790
  %v822 = vmul.f32 %v777, %v790
  %v823 = vmul.f32 %v778, %v790
  %v824 = vmul.f32 %v779, %v790
  %v825 = vmul.f32 %v780, %v790
  %v826 = vmul.f32 %v781, %v790
  %v827 = vmul.f32 %v782, %v790
  %v828 = vmul.f32 %v783, %v790
  %v829 = vmul.f32 %v784, %v790
  %830 = vadd.xlane.f32.xlu0 %v792
  %v831 = vpop.xlane.xlu0 %830
  %832 = vadd.xlane.f32.xlu0 %v793
  %v833 = vpop.xlane.xlu0 %832
  %834 = vadd.xlane.f32.xlu0 %v794
  %v835 = vpop.xlane.xlu0 %834
  %836 = vadd.xlane.f32.xlu0 %v795
  %v837 = vpop.xlane.xlu0 %836
  %838 = vadd.xlane.f32.xlu0 %v796
  %v839 = vpop.xlane.xlu0 %838
  %840 = vadd.xlane.f32.xlu0 %v797
  %v841 = vpop.xlane.xlu0 %840
  %842 = vadd.xlane.f32.xlu0 %v798
  %v843 = vpop.xlane.xlu0 %842
  %844 = vadd.xlane.f32.xlu0 %v799
  %v845 = vpop.xlane.xlu0 %844
  %846 = vadd.xlane.f32.xlu0 %v800
  %v847 = vpop.xlane.xlu0 %846
  %848 = vadd.xlane.f32.xlu0 %v801
  %v849 = vpop.xlane.xlu0 %848
  %850 = vadd.xlane.f32.xlu0 %v802
  %v851 = vpop.xlane.xlu0 %850
  %852 = vadd.xlane.f32.xlu0 %v803
  %v853 = vpop.xlane.xlu0 %852
  %854 = vadd.xlane.f32.xlu0 %v804
  %v855 = vpop.xlane.xlu0 %854
  %856 = vadd.xlane.f32.xlu0 %v805
  %v857 = vpop.xlane.xlu0 %856
  %858 = vadd.xlane.f32.xlu0 %v806
  %v859 = vpop.xlane.xlu0 %858
  %860 = vadd.xlane.f32.xlu0 %v807
  %v861 = vpop.xlane.xlu0 %860
  %862 = vadd.xlane.f32.xlu0 %v808
  %v863 = vpop.xlane.xlu0 %862
  %864 = vadd.xlane.f32.xlu0 %v809
  %v865 = vpop.xlane.xlu0 %864
  %866 = vadd.xlane.f32.xlu0 %v810
  %v867 = vpop.xlane.xlu0 %866
  %868 = vadd.xlane.f32.xlu0 %v811
  %v869 = vpop.xlane.xlu0 %868
  %870 = vadd.xlane.f32.xlu0 %v812
  %v871 = vpop.xlane.xlu0 %870
  %872 = vadd.xlane.f32.xlu0 %v813
  %v873 = vpop.xlane.xlu0 %872
  %874 = vadd.xlane.f32.xlu0 %v814
  %v875 = vpop.xlane.xlu0 %874
  %876 = vadd.xlane.f32.xlu0 %v815
  %v877 = vpop.xlane.xlu0 %876
  %878 = vadd.xlane.f32.xlu0 %v816
  %v879 = vpop.xlane.xlu0 %878
  %880 = vadd.xlane.f32.xlu0 %v817
  %v881 = vpop.xlane.xlu0 %880
  %882 = vadd.xlane.f32.xlu0 %v818
  %v883 = vpop.xlane.xlu0 %882
  %884 = vadd.xlane.f32.xlu0 %v819
  %v885 = vpop.xlane.xlu0 %884
  %886 = vadd.xlane.f32.xlu0 %v820
  %v887 = vpop.xlane.xlu0 %886
  %888 = vadd.xlane.f32.xlu0 %v821
  %v889 = vpop.xlane.xlu0 %888
  %890 = vadd.xlane.f32.xlu0 %v822
  %v891 = vpop.xlane.xlu0 %890
  %892 = vadd.xlane.f32.xlu0 %v823
  %v893 = vpop.xlane.xlu0 %892
  %894 = vadd.xlane.f32.xlu0 %v824
  %v895 = vpop.xlane.xlu0 %894
  %896 = vadd.xlane.f32.xlu0 %v825
  %v897 = vpop.xlane.xlu0 %896
  %898 = vadd.xlane.f32.xlu0 %v826
  %v899 = vpop.xlane.xlu0 %898
  %900 = vadd.xlane.f32.xlu0 %v827
  %v901 = vpop.xlane.xlu0 %900
  %902 = vadd.xlane.f32.xlu0 %v828
  %v903 = vpop.xlane.xlu0 %902
  %v904 = vsel %vm482, %v829, 0.0
  %905 = vadd.xlane.f32.xlu0 %v904
  %v906 = vpop.xlane.xlu0 %905
  %s907 = sld [smem:[#allocation2]]
  %v908 = vstv %s907
  %v909 = vadd.f32 %v831, %v908
  %v910 = vadd.f32 %v833, %v908
  %v911 = vadd.f32 %v835, %v908
  %v912 = vadd.f32 %v837, %v908
  %v913 = vadd.f32 %v839, %v908
  %v914 = vadd.f32 %v841, %v908
  %v915 = vadd.f32 %v843, %v908
  %v916 = vadd.f32 %v845, %v908
  %v917 = vadd.f32 %v847, %v908
  %v918 = vadd.f32 %v849, %v908
  %v919 = vadd.f32 %v851, %v908
  %v920 = vadd.f32 %v853, %v908
  %v921 = vadd.f32 %v855, %v908
  %v922 = vadd.f32 %v857, %v908
  %v923 = vadd.f32 %v859, %v908
  %v924 = vadd.f32 %v861, %v908
  %v925 = vadd.f32 %v863, %v908
  %v926 = vadd.f32 %v865, %v908
  %v927 = vadd.f32 %v867, %v908
  %v928 = vadd.f32 %v869, %v908
  %v929 = vadd.f32 %v871, %v908
  %v930 = vadd.f32 %v873, %v908
  %v931 = vadd.f32 %v875, %v908
  %v932 = vadd.f32 %v877, %v908
  %v933 = vadd.f32 %v879, %v908
  %v934 = vadd.f32 %v881, %v908
  %v935 = vadd.f32 %v883, %v908
  %v936 = vadd.f32 %v885, %v908
  %v937 = vadd.f32 %v887, %v908
  %v938 = vadd.f32 %v889, %v908
  %v939 = vadd.f32 %v891, %v908
  %v940 = vadd.f32 %v893, %v908
  %v941 = vadd.f32 %v895, %v908
  %v942 = vadd.f32 %v897, %v908
  %v943 = vadd.f32 %v899, %v908
  %v944 = vadd.f32 %v901, %v908
  %v945 = vadd.f32 %v903, %v908
  %v946 = vadd.f32 %v906, %v908
  %vm947 = vcmask 7168
  %948 = vst.msk [vmem:[%s7] sm:$0xff] %vm947, %v909
  %949 = vst.msk [vmem:[%s7 + $0x8] sm:$0xff] %vm947, %v910
  %950 = vst.msk [vmem:[%s7 + $0x10] sm:$0xff] %vm947, %v911
  %951 = vst.msk [vmem:[%s7 + $0x18] sm:$0xff] %vm947, %v912
  %952 = vst.msk [vmem:[%s7 + $0x20] sm:$0xff] %vm947, %v913
  %953 = vst.msk [vmem:[%s7 + $0x28] sm:$0xff] %vm947, %v914
  %954 = vst.msk [vmem:[%s7 + $0x30] sm:$0xff] %vm947, %v915
  %955 = vst.msk [vmem:[%s7 + $0x38] sm:$0xff] %vm947, %v916
  %956 = vst.msk [vmem:[%s7 + $0x40] sm:$0xff] %vm947, %v917
  %957 = vst.msk [vmem:[%s7 + $0x48] sm:$0xff] %vm947, %v918
  %958 = vst.msk [vmem:[%s7 + $0x50] sm:$0xff] %vm947, %v919
  %959 = vst.msk [vmem:[%s7 + $0x58] sm:$0xff] %vm947, %v920
  %960 = vst.msk [vmem:[%s7 + $0x60] sm:$0xff] %vm947, %v921
  %961 = vst.msk [vmem:[%s7 + $0x68] sm:$0xff] %vm947, %v922
  %962 = vst.msk [vmem:[%s7 + $0x70] sm:$0xff] %vm947, %v923
  %963 = vst.msk [vmem:[%s7 + $0x78] sm:$0xff] %vm947, %v924
  %964 = vst.msk [vmem:[%s7 + $0x80] sm:$0xff] %vm947, %v925
  %965 = vst.msk [vmem:[%s7 + $0x88] sm:$0xff] %vm947, %v926
  %966 = vst.msk [vmem:[%s7 + $0x90] sm:$0xff] %vm947, %v927
  %967 = vst.msk [vmem:[%s7 + $0x98] sm:$0xff] %vm947, %v928
  %968 = vst.msk [vmem:[%s7 + $0xa0] sm:$0xff] %vm947, %v929
  %969 = vst.msk [vmem:[%s7 + $0xa8] sm:$0xff] %vm947, %v930
  %970 = vst.msk [vmem:[%s7 + $0xb0] sm:$0xff] %vm947, %v931
  %971 = vst.msk [vmem:[%s7 + $0xb8] sm:$0xff] %vm947, %v932
  %972 = vst.msk [vmem:[%s7 + $0xc0] sm:$0xff] %vm947, %v933
  %973 = vst.msk [vmem:[%s7 + $0xc8] sm:$0xff] %vm947, %v934
  %974 = vst.msk [vmem:[%s7 + $0xd0] sm:$0xff] %vm947, %v935
  %975 = vst.msk [vmem:[%s7 + $0xd8] sm:$0xff] %vm947, %v936
  %976 = vst.msk [vmem:[%s7 + $0xe0] sm:$0xff] %vm947, %v937
  %977 = vst.msk [vmem:[%s7 + $0xe8] sm:$0xff] %vm947, %v938
  %978 = vst.msk [vmem:[%s7 + $0xf0] sm:$0xff] %vm947, %v939
  %979 = vst.msk [vmem:[%s7 + $0xf8] sm:$0xff] %vm947, %v940
  %980 = vst.msk [vmem:[%s7 + $0x100] sm:$0xff] %vm947, %v941
  %981 = vst.msk [vmem:[%s7 + $0x108] sm:$0xff] %vm947, %v942
  %982 = vst.msk [vmem:[%s7 + $0x110] sm:$0xff] %vm947, %v943
  %983 = vst.msk [vmem:[%s7 + $0x118] sm:$0xff] %vm947, %v944
  %984 = vst.msk [vmem:[%s7 + $0x120] sm:$0xff] %vm947, %v945
  %vm985 = vcmask 3072
  %986 = vst.msk [vmem:[%s7 + $0x128] sm:$0xf] %vm985, %v946
  // Predicated region
  $region30: #{tpu_custom_call.1} parent=0 // pred_check
    _
  $region31: #{tpu_custom_call.1} parent=0 // pred_check_branch
    %988 = sbr.rel (0) target = $region33
  $region32: #{tpu_custom_call.1} parent=0 // pred_region
    _
  $region33: #{tpu_custom_call.1} parent=0 // pred_fallthru
    _
  // Predicated region
  $region34: #{tpu_custom_call.1} parent=0 // pred_check
    _
  $region35: #{tpu_custom_call.1} parent=0 // pred_check_branch
    %990 = sbr.rel (0) target = $region37
  $region36: #{tpu_custom_call.1} parent=0 // pred_region
    _
  $region37: #{tpu_custom_call.1} parent=0 // pred_fallthru
    _

</llo_original>
